<compile_context>
chip_gen: v6e
topology: v6e:2x2x1
jax: 0.10.0
libtpu: 0.0.40
codegen_flags: <defaults>
</compile_context>

<pallas_src>
import functools

import jax
import jax.numpy as jnp
from jax.experimental import pallas as pl
from jax.experimental.pallas import tpu as pltpu

NEG_SLOPE = 0.01                    # nn.LeakyReLU default
BN_EPS = 1e-5                       # nn.BatchNorm2d default
_VMEM_LIMIT = 48 * 1024 * 1024      # raised scoped-VMEM limit, < 64 MiB v7x physical


def _cdiv(a, b):
    return (a + b - 1) // b


def _round_up(a, b):
    return _cdiv(a, b) * b


# --------------------------- Pallas kernels ------------------------------------------
def _conv_stats_kernel(x_ref, w_ref, y_ref, sum_ref, sq_ref):
    """One M-tile of the parity-decomposed transposed conv + BN partial stats.

    x_ref : (TM, 4*Cin)      bf16  concatenated shifted input planes
    w_ref : (4*Cin, 4*Cout)  bf16  block tap matrix (resident across the grid)
    y_ref : (TM, 4*Cout)     f32   conv output tile (parity-major channel layout)
    sum_ref / sq_ref : (1, 1, 4*Cout) f32 per-tile sum and sum-of-squares
    """
    y = jnp.dot(x_ref[...], w_ref[...], preferred_element_type=jnp.float32)
    y_ref[...] = y
    sum_ref[...] = jnp.sum(y, axis=0, keepdims=True)[None]
    sq_ref[...] = jnp.sum(y * y, axis=0, keepdims=True)[None]


def _bn_act_kernel(y_ref, scale_ref, shift_ref, o_ref):
    """Apply the folded BatchNorm affine + LeakyReLU to one M-tile."""
    y = y_ref[...] * scale_ref[...] + shift_ref[...]
    o_ref[...] = jnp.where(y >= 0, y, NEG_SLOPE * y)


# --------------------------- public wrapper ------------------------------------------
def convt_block(x_nchw, w_pt, bias, gamma, beta, *, tm=512):
    """ConvTBlock.forward.  x_nchw: (N, Cin, H, W) f32 -> (N, Cout, 2H, 2W) f32.

    w_pt is the PyTorch ConvTranspose2d weight, shape (Cin, Cout, 3, 3).
    `bias` is accepted for interface fidelity but unused: under training-mode
    BatchNorm (batch statistics) the conv bias cancels exactly.
    """
    del bias
    N, Cin, H, W = x_nchw.shape
    Cout = w_pt.shape[1]
    C4in, C4out = 4 * Cin, 4 * Cout
    M = N * H * W

    # ---- glue: one concatenated shifted-plane input stream (M, 4*Cin), bf16 ------
    x = jnp.transpose(x_nchw, (0, 2, 3, 1)).astype(jnp.float32)       # NHWC
    xp = jnp.pad(x, ((0, 0), (0, 1), (0, 1), (0, 0)))                 # zero +1 edge
    x_cat = jnp.concatenate(
        [xp[:, :H, :W, :],    # x[h,   w]
         xp[:, :H, 1:, :],    # x[h,   w+1]
         xp[:, 1:, :W, :],    # x[h+1, w]
         xp[:, 1:, 1:, :]],   # x[h+1, w+1]
        axis=-1).reshape(M, C4in).astype(jnp.bfloat16)

    # ---- glue: fold the nine taps into one (4*Cin, 4*Cout) block weight ----------
    # ConvTranspose2d(k=3, s=2, p=1, op=1) parity decomposition:
    #   o_ee = x00 @ w[1,1]
    #   o_eo = x01 @ w[1,0] + x00 @ w[1,2]
    #   o_oe = x10 @ w[0,1] + x00 @ w[2,1]
    #   o_oo = x11 @ w[0,0] + x10 @ w[0,2] + x01 @ w[2,0] + x00 @ w[2,2]
    w = jnp.transpose(w_pt, (2, 3, 0, 1)).astype(jnp.float32)         # (kh,kw,Cin,Cout)
    z = jnp.zeros((Cin, Cout), jnp.float32)
    w_big = jnp.concatenate([
        jnp.concatenate([w[1, 1], w[1, 2], w[2, 1], w[2, 2]], axis=1),   # vs x00
        jnp.concatenate([z,       w[1, 0], z,       w[2, 0]], axis=1),   # vs x01
        jnp.concatenate([z,       z,       w[0, 1], w[0, 2]], axis=1),   # vs x10
        jnp.concatenate([z,       z,       z,       w[0, 0]], axis=1),   # vs x11
    ], axis=0).astype(jnp.bfloat16)                                      # (4Cin,4Cout)

    # ---- tile the flattened M = N*H*W rows ----------------------------------------
    tm = int(min(_round_up(tm, 8), _round_up(M, 8)))
    n_tiles = _cdiv(M, tm)
    m_pad = n_tiles * tm
    if m_pad > M:                       # zero rows -> zero conv output (no bias),
        x_cat = jnp.pad(x_cat, ((0, m_pad - M), (0, 0)))   # so BN stats stay exact

    # ---- pass 1: conv matmul + per-tile BN partial sums ---------------------------
    flops = 2 * m_pad * C4in * C4out
    bytes_accessed = (m_pad * C4in * 2 + C4in * C4out * 2
                      + m_pad * C4out * 4 + 2 * n_tiles * C4out * 4)
    y_conv, psum, psq = pl.pallas_call(
        _conv_stats_kernel,
        out_shape=(jax.ShapeDtypeStruct((m_pad, C4out), jnp.float32),
                   jax.ShapeDtypeStruct((n_tiles, 1, C4out), jnp.float32),
                   jax.ShapeDtypeStruct((n_tiles, 1, C4out), jnp.float32)),
        grid_spec=pltpu.PrefetchScalarGridSpec(
            num_scalar_prefetch=0,
            grid=(n_tiles,),
            in_specs=[
                pl.BlockSpec((tm, C4in), lambda i: (i, 0)),
                pl.BlockSpec((C4in, C4out), lambda i: (0, 0)),  # weights stay resident
            ],
            out_specs=[
                pl.BlockSpec((tm, C4out), lambda i: (i, 0)),
                pl.BlockSpec((1, 1, C4out), lambda i: (i, 0, 0)),
                pl.BlockSpec((1, 1, C4out), lambda i: (i, 0, 0)),
            ]),
        compiler_params=pltpu.CompilerParams(
            dimension_semantics=("parallel",),
            vmem_limit_bytes=_VMEM_LIMIT),
        cost_estimate=pl.CostEstimate(flops=flops, transcendentals=0,
                                      bytes_accessed=bytes_accessed),
    )(x_cat, w_big)

    # ---- tiny XLA reduce: batch statistics -> folded scale/shift ------------------
    # TODO(synk): BatchNorm running_mean/running_var buffer updates (a training-time
    # side effect, not part of the returned value) are not modeled.
    count = jnp.float32(4 * M)                           # N * 2H * 2W per channel
    s = jnp.sum(psum, axis=(0, 1)).reshape(4, Cout).sum(axis=0)
    sq = jnp.sum(psq, axis=(0, 1)).reshape(4, Cout).sum(axis=0)
    mean = s / count
    var = jnp.maximum(sq / count - mean * mean, 0.0)     # biased batch variance
    inv = jax.lax.rsqrt(var + BN_EPS)
    scale = gamma.astype(jnp.float32) * inv
    shift = beta.astype(jnp.float32) - mean * scale
    scale4 = jnp.tile(scale, 4).reshape(1, C4out)        # parity-major channel layout
    shift4 = jnp.tile(shift, 4).reshape(1, C4out)

    # ---- pass 2: BN affine + LeakyReLU --------------------------------------------
    out_flat = pl.pallas_call(
        _bn_act_kernel,
        out_shape=jax.ShapeDtypeStruct((m_pad, C4out), jnp.float32),
        grid_spec=pltpu.PrefetchScalarGridSpec(
            num_scalar_prefetch=0,
            grid=(n_tiles,),
            in_specs=[
                pl.BlockSpec((tm, C4out), lambda i: (i, 0)),
                pl.BlockSpec((1, C4out), lambda i: (0, 0)),
                pl.BlockSpec((1, C4out), lambda i: (0, 0)),
            ],
            out_specs=pl.BlockSpec((tm, C4out), lambda i: (i, 0))),
        compiler_params=pltpu.CompilerParams(
            dimension_semantics=("parallel",),
            vmem_limit_bytes=_VMEM_LIMIT),
    )(y_conv, scale4, shift4)

    # ---- glue: interleave parity planes -> (N, Cout, 2H, 2W) ----------------------
    y = out_flat[:M].reshape(N, H, W, 2, 2, Cout)        # (.., row-par, col-par, C)
    y = jnp.transpose(y, (0, 1, 3, 2, 4, 5)).reshape(N, 2 * H, 2 * W, Cout)
    return jnp.transpose(y, (0, 3, 1, 2))                # back to NCHW


# --------------------------- pure-JAX reference --------------------------------------
def _reference(x_nchw, w_pt, bias, gamma, beta):
    Cout = w_pt.shape[1]
    rhs = jnp.transpose(jnp.flip(w_pt, (2, 3)), (1, 0, 2, 3))    # (Cout, Cin, 3, 3)
    conv = jax.lax.conv_general_dilated(
        x_nchw.astype(jnp.float32), rhs.astype(jnp.float32),
        window_strides=(1, 1), padding=((1, 2), (1, 2)), lhs_dilation=(2, 2),
        dimension_numbers=("NCHW", "OIHW", "NCHW"))
    conv = conv + bias.reshape(1, Cout, 1, 1)
    mean = conv.mean(axis=(0, 2, 3), keepdims=True)
    var = ((conv - mean) ** 2).mean(axis=(0, 2, 3), keepdims=True)
    y = (conv - mean) * jax.lax.rsqrt(var + BN_EPS)
    y = y * gamma.reshape(1, Cout, 1, 1) + beta.reshape(1, Cout, 1, 1)
    return jnp.where(y >= 0, y, NEG_SLOPE * y)


if __name__ == "__main__":
    key = jax.random.PRNGKey(0)
    k_x, k_w, k_b, k_g, k_bt = jax.random.split(key, 5)

    N, Cin, Cout, H, W = 2, 4, 8, 16, 16
    x = jax.random.normal(k_x, (N, Cin, H, W), jnp.float32)
    # ConvTranspose2d weight shape: (in_channels, out_channels, kH, kW)
    w_pt = 0.1 * jax.random.normal(k_w, (Cin, Cout, 3, 3), jnp.float32)
    bias = 0.1 * jax.random.normal(k_b, (Cout,), jnp.float32)
    gamma = 1.0 + 0.1 * jax.random.normal(k_g, (Cout,), jnp.float32)
    beta = 0.1 * jax.random.normal(k_bt, (Cout,), jnp.float32)

    fwd = jax.jit(functools.partial(convt_block, tm=128))   # tm=128 -> 4-step grid
    out = jax.block_until_ready(fwd(x, w_pt, bias, gamma, beta))
    assert out.shape == (N, Cout, 2 * H, 2 * W), out.shape

    # The kernel intentionally feeds the MXU bf16 operands (f32 accumulation), so
    # compare against the f32 reference evaluated on bf16-rounded x / w: this
    # isolates structural correctness from the intended input-rounding precision.
    x_r = x.astype(jnp.bfloat16).astype(jnp.float32)
    w_r = w_pt.astype(jnp.bfloat16).astype(jnp.float32)
    ref = _reference(x_r, w_r, bias, gamma, beta)
    err = float(jnp.max(jnp.abs(out - ref)))
    assert jnp.allclose(out, ref, atol=1e-3, rtol=1e-3), err

    print("KERNEL_OK")
</pallas_src>

<mosaic_0001>
module attributes {stable_mosaic.version = 11 : i64} {
  func.func @_conv_stats_kernel(%arg0: i32, %arg1: memref<128x16xbf16, #tpu.memory_space<vmem>>, %arg2: memref<16x32xbf16, #tpu.memory_space<vmem>>, %arg3: memref<128x32xf32, #tpu.memory_space<vmem>>, %arg4: memref<1x1x32xf32, #tpu.memory_space<vmem>>, %arg5: memref<1x1x32xf32, #tpu.memory_space<vmem>>) attributes {dimension_semantics = [#tpu.dimension_semantics<parallel>], iteration_bounds = array<i64: 4>, scalar_prefetch = 0 : i64, scratch_operands = 0 : i64, tpu.core_type = #tpu.core_type<tc>, window_params = [{transform_indices = @transform_0, window_bounds = array<i64: 128, 16>}, {pipeline_mode = #tpu.pipeline_mode<synchronous>, transform_indices = @transform_1, window_bounds = array<i64: 16, 32>}, {transform_indices = @transform_2, window_bounds = array<i64: 128, 32>}, {transform_indices = @transform_3, window_bounds = array<i64: 1, 1, 32>}, {transform_indices = @transform_4, window_bounds = array<i64: 1, 1, 32>}]} {
    %c0 = arith.constant 0 : index
    %c0_0 = arith.constant 0 : index
    %0 = vector.load %arg1[%c0, %c0_0] : memref<128x16xbf16, #tpu.memory_space<vmem>>, vector<128x16xbf16>
    %c0_1 = arith.constant 0 : index
    %c0_2 = arith.constant 0 : index
    %1 = vector.load %arg2[%c0_1, %c0_2] : memref<16x32xbf16, #tpu.memory_space<vmem>>, vector<16x32xbf16>
    %cst = arith.constant dense<0.000000e+00> : vector<128x32xf32>
    %2 = tpu.matmul %0, %1, %cst {dimension_numbers = #tpu.dot_dimension_numbers<[1], [0], [0], [1], [0, 0, 1, 1], [], []>} : vector<128x16xbf16>, vector<16x32xbf16>, vector<128x32xf32> -> vector<128x32xf32>
    %c0_3 = arith.constant 0 : index
    %c0_4 = arith.constant 0 : index
    %3 = vector.load %arg3[%c0_3, %c0_4] : memref<128x32xf32, #tpu.memory_space<vmem>>, vector<128x32xf32>
    tpu.vector_store %arg3[%c0_3, %c0_4], %2 {strides = array<i32>} : memref<128x32xf32, #tpu.memory_space<vmem>>, vector<128x32xf32>,
    %cst_5 = arith.constant dense<0.000000e+00> : vector<32xf32>
    %4 = vector.multi_reduction <add>, %2, %cst_5 [0] : vector<128x32xf32> to vector<32xf32>
    %5 = vector.shape_cast %4 : vector<32xf32> to vector<1x32xf32>
    %6 = vector.shape_cast %5 : vector<1x32xf32> to vector<1x1x32xf32>
    %c0_6 = arith.constant 0 : index
    %c0_7 = arith.constant 0 : index
    %c0_8 = arith.constant 0 : index
    %7 = vector.load %arg4[%c0_6, %c0_7, %c0_8] : memref<1x1x32xf32, #tpu.memory_space<vmem>>, vector<1x1x32xf32>
    tpu.vector_store %arg4[%c0_6, %c0_7, %c0_8], %6 {strides = array<i32>} : memref<1x1x32xf32, #tpu.memory_space<vmem>>, vector<1x1x32xf32>,
    %8 = arith.mulf %2, %2 : vector<128x32xf32>
    %cst_9 = arith.constant dense<0.000000e+00> : vector<32xf32>
    %9 = vector.multi_reduction <add>, %8, %cst_9 [0] : vector<128x32xf32> to vector<32xf32>
    %10 = vector.shape_cast %9 : vector<32xf32> to vector<1x32xf32>
    %11 = vector.shape_cast %10 : vector<1x32xf32> to vector<1x1x32xf32>
    %c0_10 = arith.constant 0 : index
    %c0_11 = arith.constant 0 : index
    %c0_12 = arith.constant 0 : index
    %12 = vector.load %arg5[%c0_10, %c0_11, %c0_12] : memref<1x1x32xf32, #tpu.memory_space<vmem>>, vector<1x1x32xf32>
    tpu.vector_store %arg5[%c0_10, %c0_11, %c0_12], %11 {strides = array<i32>} : memref<1x1x32xf32, #tpu.memory_space<vmem>>, vector<1x1x32xf32>,
    return
  }
  func.func @transform_0(%arg0: i32) -> (i32, i32) {
    %c0_i32 = arith.constant 0 : i32
    %c0_i32_0 = arith.constant 0 : i32
    return %arg0, %c0_i32 : i32, i32
  }
  func.func @transform_1(%arg0: i32) -> (i32, i32) {
    %c0_i32 = arith.constant 0 : i32
    %c0_i32_0 = arith.constant 0 : i32
    %c0_i32_1 = arith.constant 0 : i32
    return %c0_i32, %c0_i32_0 : i32, i32
  }
  func.func @transform_2(%arg0: i32) -> (i32, i32) {
    %c0_i32 = arith.constant 0 : i32
    %c0_i32_0 = arith.constant 0 : i32
    return %arg0, %c0_i32 : i32, i32
  }
  func.func @transform_3(%arg0: i32) -> (i32, i32, i32) {
    %c0_i32 = arith.constant 0 : i32
    %c0_i32_0 = arith.constant 0 : i32
    %c0_i32_1 = arith.constant 0 : i32
    return %arg0, %c0_i32, %c0_i32_0 : i32, i32, i32
  }
  func.func @transform_4(%arg0: i32) -> (i32, i32, i32) {
    %c0_i32 = arith.constant 0 : i32
    %c0_i32_0 = arith.constant 0 : i32
    %c0_i32_1 = arith.constant 0 : i32
    return %arg0, %c0_i32, %c0_i32_0 : i32, i32, i32
  }
}

module attributes {stable_mosaic.version = 11 : i64} {
  func.func @_bn_act_kernel(%arg0: i32, %arg1: memref<128x32xf32, #tpu.memory_space<vmem>>, %arg2: memref<1x32xf32, #tpu.memory_space<vmem>>, %arg3: memref<1x32xf32, #tpu.memory_space<vmem>>, %arg4: memref<128x32xf32, #tpu.memory_space<vmem>>) attributes {dimension_semantics = [#tpu.dimension_semantics<parallel>], iteration_bounds = array<i64: 4>, scalar_prefetch = 0 : i64, scratch_operands = 0 : i64, tpu.core_type = #tpu.core_type<tc>, window_params = [{transform_indices = @transform_0, window_bounds = array<i64: 128, 32>}, {pipeline_mode = #tpu.pipeline_mode<synchronous>, transform_indices = @transform_1, window_bounds = array<i64: 1, 32>}, {pipeline_mode = #tpu.pipeline_mode<synchronous>, transform_indices = @transform_2, window_bounds = array<i64: 1, 32>}, {transform_indices = @transform_3, window_bounds = array<i64: 128, 32>}]} {
    %c0 = arith.constant 0 : index
    %c0_0 = arith.constant 0 : index
    %0 = vector.load %arg1[%c0, %c0_0] : memref<128x32xf32, #tpu.memory_space<vmem>>, vector<128x32xf32>
    %c0_1 = arith.constant 0 : index
    %c0_2 = arith.constant 0 : index
    %1 = vector.load %arg2[%c0_1, %c0_2] : memref<1x32xf32, #tpu.memory_space<vmem>>, vector<1x32xf32>
    %2 = vector.broadcast %1 : vector<1x32xf32> to vector<128x32xf32>
    %3 = arith.mulf %0, %2 : vector<128x32xf32>
    %c0_3 = arith.constant 0 : index
    %c0_4 = arith.constant 0 : index
    %4 = vector.load %arg3[%c0_3, %c0_4] : memref<1x32xf32, #tpu.memory_space<vmem>>, vector<1x32xf32>
    %5 = vector.broadcast %4 : vector<1x32xf32> to vector<128x32xf32>
    %6 = arith.addf %3, %5 : vector<128x32xf32>
    %cst = arith.constant 0.000000e+00 : f32
    %7 = vector.broadcast %cst : f32 to vector<128x32xf32>
    %8 = arith.cmpf oge, %6, %7 : vector<128x32xf32>
    %cst_5 = arith.constant 0.00999999977 : f32
    %9 = vector.broadcast %cst_5 : f32 to vector<128x32xf32>
    %10 = arith.mulf %9, %6 : vector<128x32xf32>
    %11 = arith.select %8, %6, %10 : vector<128x32xi1>, vector<128x32xf32>
    %c0_6 = arith.constant 0 : index
    %c0_7 = arith.constant 0 : index
    %12 = vector.load %arg4[%c0_6, %c0_7] : memref<128x32xf32, #tpu.memory_space<vmem>>, vector<128x32xf32>
    tpu.vector_store %arg4[%c0_6, %c0_7], %11 {strides = array<i32>} : memref<128x32xf32, #tpu.memory_space<vmem>>, vector<128x32xf32>,
    return
  }
  func.func @transform_0(%arg0: i32) -> (i32, i32) {
    %c0_i32 = arith.constant 0 : i32
    %c0_i32_0 = arith.constant 0 : i32
    return %arg0, %c0_i32 : i32, i32
  }
  func.func @transform_1(%arg0: i32) -> (i32, i32) {
    %c0_i32 = arith.constant 0 : i32
    %c0_i32_0 = arith.constant 0 : i32
    %c0_i32_1 = arith.constant 0 : i32
    return %c0_i32, %c0_i32_0 : i32, i32
  }
  func.func @transform_2(%arg0: i32) -> (i32, i32) {
    %c0_i32 = arith.constant 0 : i32
    %c0_i32_0 = arith.constant 0 : i32
    %c0_i32_1 = arith.constant 0 : i32
    return %c0_i32, %c0_i32_0 : i32, i32
  }
  func.func @transform_3(%arg0: i32) -> (i32, i32) {
    %c0_i32 = arith.constant 0 : i32
    %c0_i32_0 = arith.constant 0 : i32
    return %arg0, %c0_i32 : i32, i32
  }
}

</mosaic_0001>

<llo_original>
// kernel: tile.18
$region0: #{tile.18}
  #allocation0 [shape = 's32[1]{0}', space=sflag, size = 0x4, scoped, tag = 'scoped memory for tile.18']
  %s0 = inlined_call_operand.vmem [shape: f32[8], index: 0, kind: input, shape index: {}]
  %s1 = inlined_call_operand.vmem [shape: f32[4,8], index: 1, kind: output, shape index: {}]
  // Predicated region
  $region2: #{tile.18} parent=0 // pred_check
    _
  $region3: #{tile.18} parent=0 // pred_check_branch
    %3 = sbr.rel (0) target = $region5
  $region4: #{tile.18} parent=0 // pred_region
    _
  $region5: #{tile.18} parent=0 // pred_fallthru
    _
  %v4 = vld [vmem:[%s0] ss:$0 sm:$0xff]
  %5 = vst [vmem:[%s1] sm:$0xf] %v4

// kernel: tile.19
$region0: #{tile.19}
  %s0 = inlined_call_operand.vmem [shape: f32[4,8], index: 0, kind: input, shape index: {}]
  %s1 = inlined_call_operand.vmem [shape: f32[1,32], index: 1, kind: output, shape index: {}]
  $region1: #{tile.19} parent=0
    #allocation0 [shape = 'u8[4096]{0}', space=vmem, size = 0x1000, scoped, tag = 'scoped mem for output reshape']
    #allocation1 [shape = 'u8[4096]{0}', space=vmem, size = 0x1000, scoped, tag = 'scoped mem for input reshape']
    %s3 = sshll.u32 1, 4
    %s4 = ssub.s32 %s3, 1
    %v5 = vld [vmem:[%s0] sm:%s4]
    %6 = vst [vmem:[#allocation1] sm:%s4] %v5
    %v7 = vld [vmem:[#allocation1] sm:$0x1]
    %vm8 = vcmask 64512
    %9 = vst.msk [vmem:[#allocation0] sm:$0x1] %vm8, %v7
    %s10 = scalar_lea.vmem [#allocation1], 3
    %v11 = vld [vmem:[%s10] sm:$0x1]
    %12 = vrot.lane.b32.xlu0 %v11, 24
    %v13 = vpop.permute.xlu0 %12
    %vm14 = vcmask 261312
    %15 = vst.msk [vmem:[#allocation0] sm:$0x1] %vm14, %v13
    %s16 = scalar_lea.vmem [#allocation1], 2
    %v17 = vld [vmem:[%s16] sm:$0x1]
    %18 = vrot.lane.b32.xlu0 %v17, 16
    %v19 = vpop.permute.xlu0 %18
    %vm20 = vcmask 195712
    %21 = vst.msk [vmem:[#allocation0] sm:$0x1] %vm20, %v19
    %s22 = scalar_lea.vmem [#allocation1], 1
    %v23 = vld [vmem:[%s22] sm:$0x1]
    %24 = vrot.lane.b32.xlu0 %v23, 8
    %v25 = vpop.permute.xlu0 %24
    %vm26 = vcmask 130112
    %27 = vst.msk [vmem:[#allocation0] sm:$0x1] %vm26, %v25
    %s29 = sshll.u32 1, 1
    %s30 = ssub.s32 %s29, 1
    %v32 = vld [vmem:[#allocation0] sm:%s30]
    %s33 = sshll.u32 1, 1
    %s34 = ssub.s32 %s33, 1
    %35 = vst [vmem:[%s1] sm:%s34] %v32

// kernel: convt_block.3
$region0: #{convt_block.3}
  #allocation0 [shape = 'u32[]', space=smem, size = 0x4, offset = 0x4, fixed_abs, tag = 'smem constant byte address 0x4 - core index']
  #allocation1 [shape = 'u32[144,128]{1,0:T(1,128)}', space=vmem, size = 0x12000, scoped, tag = 'internal scratch']
  %s0 = inlined_call_operand.vmem [shape: f32[512,32], index: 0, kind: input, shape index: {}]
  %s1 = inlined_call_operand.vmem [shape: f32[1,32], index: 1, kind: input, shape index: {}]
  %s2 = inlined_call_operand.vmem [shape: f32[1,32], index: 2, kind: input, shape index: {}]
  %s3 = inlined_call_operand.vmem [shape: f32[512,32], index: 3, kind: output, shape index: {}]
  %s4 = sld [smem:[#allocation0]]
  $region45: #{convt_block.3} parent=0
    _
  %s6 = ssub.s32 1, %s4
  %s7 = scalar_select 0, %s6, %s4
  loop: start=0, step=1, limit=6
  $region2: #{convt_block.3} parent=0 // loop_pre_header
    _
  $region3: #{convt_block.3} parent=0 // loop_header
    %s9 = sphi 0, %s13
    %p10 = scmp.ge.s32.totalorder %s9, 6
    %s19 = sphi 0, %s21
    %s22 = sphi 0, %s19
    %s23 = sphi 0, %s22
    %s39 = sphi 0, %s23
    %s43 = sphi 0, %s43
    %s45 = sphi 0, %s43
    %s46 = sphi 0, %s45
    %s60 = sphi 0, %s46
    %s64 = sphi 0, %s64
    %s66 = sphi 0, %s64
    %s67 = sphi 0, %s66
    %s81 = sphi 0, %s67
    %s87 = sphi 0, %s89
    %s90 = sphi 0, %s87
    %s91 = sphi 0, %s90
    %s107 = sphi 0, %s91
  $region4: #{convt_block.3} parent=0 // loop_header_branch
    %12 = sbr.rel (%p10) target = $region8
  $region5: #{convt_block.3} parent=0 // loop_body
    %s14 = ssub.s32 %s9, 1
    %s15 = ssub.s32 %s9, 2
    %s16 = sadd.s32 %s9, 1
    %s17 = ssub.s32 %s9, %s16
    %p18 = scmp.eq.s32.totalorder %s17, 0
    %s20 = sadd.s32 %s19, 1
    %s21 = scalar_select %p18, %s19, %s20
    %p24 = pneg %p18
    %p25 = scmp.eq.s32.totalorder %s9, 3
    %p26 = por %p24, %p25
    %p27 = scmp.ne.s32.totalorder %s19, %s22
    %p28 = scmp.eq.s32.totalorder %s9, 0
    %p29 = por %p27, %p28
    %p30 = scmp.ne.s32.totalorder %s19, %s22
    %p31 = scmp.eq.s32.totalorder %s14, 3
    %p32 = por %p30, %p31
    %p33 = scmp.ne.s32.totalorder %s22, %s23
    %p34 = scmp.eq.s32.totalorder %s14, 0
    %p35 = por %p33, %p34
    %p36 = scmp.ne.s32.totalorder %s22, %s23
    %p37 = scmp.eq.s32.totalorder %s15, 3
    %p38 = por %p36, %p37
    %p40 = scmp.ne.s32.totalorder %s23, %s39
    %p41 = scmp.eq.s32.totalorder %s15, 0
    %p42 = por %p40, %p41
    %s44 = sadd.s32 %s43, 1
    %p47 = scmp.eq.s32.totalorder %s9, 3
    %p48 = scmp.ne.s32.totalorder %s43, %s45
    %p49 = scmp.eq.s32.totalorder %s9, 0
    %p50 = por %p48, %p49
    %p51 = scmp.ne.s32.totalorder %s43, %s45
    %p52 = scmp.eq.s32.totalorder %s14, 3
    %p53 = por %p51, %p52
    %p54 = scmp.ne.s32.totalorder %s45, %s46
    %p55 = scmp.eq.s32.totalorder %s14, 0
    %p56 = por %p54, %p55
    %p57 = scmp.ne.s32.totalorder %s45, %s46
    %p58 = scmp.eq.s32.totalorder %s15, 3
    %p59 = por %p57, %p58
    %p61 = scmp.ne.s32.totalorder %s46, %s60
    %p62 = scmp.eq.s32.totalorder %s15, 0
    %p63 = por %p61, %p62
    %s65 = sadd.s32 %s64, 1
    %p68 = scmp.eq.s32.totalorder %s9, 3
    %p69 = scmp.ne.s32.totalorder %s64, %s66
    %p70 = scmp.eq.s32.totalorder %s9, 0
    %p71 = por %p69, %p70
    %p72 = scmp.ne.s32.totalorder %s64, %s66
    %p73 = scmp.eq.s32.totalorder %s14, 3
    %p74 = por %p72, %p73
    %p75 = scmp.ne.s32.totalorder %s66, %s67
    %p76 = scmp.eq.s32.totalorder %s14, 0
    %p77 = por %p75, %p76
    %p78 = scmp.ne.s32.totalorder %s66, %s67
    %p79 = scmp.eq.s32.totalorder %s15, 3
    %p80 = por %p78, %p79
    %p82 = scmp.ne.s32.totalorder %s67, %s81
    %p83 = scmp.eq.s32.totalorder %s15, 0
    %p84 = por %p82, %p83
    %s85 = ssub.s32 %s9, %s16
    %p86 = scmp.eq.s32.totalorder %s85, 0
    %s88 = sadd.s32 %s87, 1
    %s89 = scalar_select %p86, %s87, %s88
    %p92 = pneg %p86
    %p93 = scmp.eq.s32.totalorder %s9, 3
    %p94 = por %p92, %p93
    %p95 = scmp.ne.s32.totalorder %s87, %s90
    %p96 = scmp.eq.s32.totalorder %s9, 0
    %p97 = por %p95, %p96
    %p98 = scmp.ne.s32.totalorder %s87, %s90
    %p99 = scmp.eq.s32.totalorder %s14, 3
    %p100 = por %p98, %p99
    %p101 = scmp.ne.s32.totalorder %s90, %s91
    %p102 = scmp.eq.s32.totalorder %s14, 0
    %p103 = por %p101, %p102
    %p104 = scmp.ne.s32.totalorder %s90, %s91
    %p105 = scmp.eq.s32.totalorder %s15, 3
    %p106 = por %p104, %p105
    %p108 = scmp.ne.s32.totalorder %s91, %s107
    %p109 = scmp.eq.s32.totalorder %s15, 0
    %p110 = por %p108, %p109
    %p111 = scmp.le.s32.totalorder 1, %s9
    %p112 = scmp.lt.s32.totalorder %s9, 5
    %p113 = pnand %p111, %p112
    %p114 = pneg %p113
    // Predicated region
    $region9: #{convt_block.3} parent=5 // pred_check
      _
    $region10: #{convt_block.3} parent=5 // pred_check_branch
      %116 = sbr.rel (%p113) target = $region12
    $region11: #{convt_block.3} parent=5 // pred_region
      %s117 = ssub.s32 %s9, 1
      // Predicated region
      $region13: #{convt_block.3} parent=11 // pred_check
        %p118 = pneg %p56
      $region14: #{convt_block.3} parent=11 // pred_check_branch
        %120 = sbr.rel (%p118) target = $region16
      $region15: #{convt_block.3} parent=11 // pred_region
        _
      $region16: #{convt_block.3} parent=11 // pred_fallthru
        _
      // Predicated region
      $region17: #{convt_block.3} parent=11 // pred_check
        %p121 = pneg %p77
      $region18: #{convt_block.3} parent=11 // pred_check_branch
        %123 = sbr.rel (%p121) target = $region20
      $region19: #{convt_block.3} parent=11 // pred_region
        _
      $region20: #{convt_block.3} parent=11 // pred_fallthru
        _
    $region12: #{convt_block.3} parent=5 // pred_fallthru
      _
    %p124 = scmp.lt.s32.totalorder %s9, 4
    // Predicated region
    $region21: #{convt_block.3} parent=5 // pred_check
      %p125 = pneg %p124
    $region22: #{convt_block.3} parent=5 // pred_check_branch
      %127 = sbr.rel (%p125) target = $region24
    $region23: #{convt_block.3} parent=5 // pred_region
      // Predicated region
      $region25: #{convt_block.3} parent=23 // pred_check
        %p128 = pneg %p29
      $region26: #{convt_block.3} parent=23 // pred_check_branch
        %130 = sbr.rel (%p128) target = $region28
      $region27: #{convt_block.3} parent=23 // pred_region
        %s131 = smul.u32 16, %s9
        %p132 = scmp.lt.s32.totalorder %s131, 63
        %s133 = scalar_select %p132, %s131, 63
        %s134 = smul.addr %s133, 8
        %s135 = scalar_lea.vmem %s0, %s134
        %s136 = smul.u32 16, %s9
      $region28: #{convt_block.3} parent=23 // pred_fallthru
        _
    $region24: #{convt_block.3} parent=5 // pred_fallthru
      _
    %p137 = scmp.le.s32.totalorder 1, %s9
    %p138 = scmp.lt.s32.totalorder %s9, 5
    %p139 = pnand %p137, %p138
    %p140 = pneg %p139
    // Predicated region
    $region29: #{convt_block.3} parent=5 // pred_check
      _
    $region30: #{convt_block.3} parent=5 // pred_check_branch
      %142 = sbr.rel (%p139) target = $region32
    $region31: #{convt_block.3} parent=5 // pred_region
      %s143 = ssub.s32 %s9, 1
      %s144 = smul.u32 16, %s14
      %p145 = scmp.lt.s32.totalorder %s144, 63
      %s146 = scalar_select %p145, %s144, 63
      %s147 = smul.addr %s146, 8
      %s148 = scalar_lea.vmem %s0, %s147
      %p149 = pneg %p35
      %p150 = pneg %p32
      %p151 = pneg %p56
      %p152 = pneg %p53
      %p153 = pneg %p77
      %p154 = pneg %p74
      %p155 = pneg %p103
      %p156 = pneg %p100
      %s157 = smul.u32 16, %s14
      %p158 = scmp.lt.s32.totalorder %s157, 63
      %s159 = scalar_select %p158, %s157, 63
      %s160 = smul.addr %s159, 8
      %s161 = scalar_lea.vmem %s3, %s160
      %s162 = smul.u32 16, %s14
      %p163 = scmp.lt.s32.totalorder %s162, 63
      %s164 = scalar_select %p163, %s162, 63
      %s165 = smul.addr %s164, 8
      %s166 = scalar_lea.vmem %s0, %s165
      %s167 = smul.u32 16, %s14
      %s168 = smul.u32 16, %s14
      %p169 = scmp.lt.s32.totalorder %s168, 63
      %s170 = scalar_select %p169, %s168, 63
      %s171 = smul.addr %s170, 8
      %s172 = scalar_lea.vmem %s3, %s171
      %s173 = smul.u32 16, %s14
      %v174 = vld [vmem:[%s166] sm:$0xff]
      %v175 = vld [vmem:[%s166 + $0x8] sm:$0xff]
      %v176 = vld [vmem:[%s166 + $0x10] sm:$0xff]
      %v177 = vld [vmem:[%s166 + $0x18] sm:$0xff]
      %v178 = vld [vmem:[%s166 + $0x20] sm:$0xff]
      %v179 = vld [vmem:[%s166 + $0x28] sm:$0xff]
      %v180 = vld [vmem:[%s166 + $0x30] sm:$0xff]
      %v181 = vld [vmem:[%s166 + $0x38] sm:$0xff]
      %v182 = vld [vmem:[%s166 + $0x40] sm:$0xff]
      %v183 = vld [vmem:[%s166 + $0x48] sm:$0xff]
      %v184 = vld [vmem:[%s166 + $0x50] sm:$0xff]
      %v185 = vld [vmem:[%s166 + $0x58] sm:$0xff]
      %v186 = vld [vmem:[%s166 + $0x60] sm:$0xff]
      %v187 = vld [vmem:[%s166 + $0x68] sm:$0xff]
      %v188 = vld [vmem:[%s166 + $0x70] sm:$0xff]
      %v189 = vld [vmem:[%s166 + $0x78] sm:$0xff]
      %v190 = vld [vmem:[%s1] sm:$0x1]
      %v192 = vlaneseq
      %v193 = vshrl.u32 %v192, 7
      %v194 = vsub.s32 0, %v193
      %v195 = vrot.slane %v190, %v194
      %v197 = vmul.f32 %v174, %v195
      %v198 = vmul.f32 %v175, %v195
      %v199 = vmul.f32 %v176, %v195
      %v200 = vmul.f32 %v177, %v195
      %v201 = vmul.f32 %v178, %v195
      %v202 = vmul.f32 %v179, %v195
      %v203 = vmul.f32 %v180, %v195
      %v204 = vmul.f32 %v181, %v195
      %v205 = vmul.f32 %v182, %v195
      %v206 = vmul.f32 %v183, %v195
      %v207 = vmul.f32 %v184, %v195
      %v208 = vmul.f32 %v185, %v195
      %v209 = vmul.f32 %v186, %v195
      %v210 = vmul.f32 %v187, %v195
      %v211 = vmul.f32 %v188, %v195
      %v212 = vmul.f32 %v189, %v195
      %v213 = vld [vmem:[%s2] sm:$0x1]
      %v215 = vlaneseq
      %v216 = vshrl.u32 %v215, 7
      %v217 = vsub.s32 0, %v216
      %v218 = vrot.slane %v213, %v217
      %v220 = vadd.f32 %v197, %v218
      %v221 = vadd.f32 %v198, %v218
      %v222 = vadd.f32 %v199, %v218
      %v223 = vadd.f32 %v200, %v218
      %v224 = vadd.f32 %v201, %v218
      %v225 = vadd.f32 %v202, %v218
      %v226 = vadd.f32 %v203, %v218
      %v227 = vadd.f32 %v204, %v218
      %v228 = vadd.f32 %v205, %v218
      %v229 = vadd.f32 %v206, %v218
      %v230 = vadd.f32 %v207, %v218
      %v231 = vadd.f32 %v208, %v218
      %v232 = vadd.f32 %v209, %v218
      %v233 = vadd.f32 %v210, %v218
      %v234 = vadd.f32 %v211, %v218
      %v235 = vadd.f32 %v212, %v218
      %vm236 = vcmp.ge.f32.partialorder %v220, 0.0
      %vm237 = vcmp.ge.f32.partialorder %v221, 0.0
      %vm238 = vcmp.ge.f32.partialorder %v222, 0.0
      %vm239 = vcmp.ge.f32.partialorder %v223, 0.0
      %vm240 = vcmp.ge.f32.partialorder %v224, 0.0
      %vm241 = vcmp.ge.f32.partialorder %v225, 0.0
      %vm242 = vcmp.ge.f32.partialorder %v226, 0.0
      %vm243 = vcmp.ge.f32.partialorder %v227, 0.0
      %vm244 = vcmp.ge.f32.partialorder %v228, 0.0
      %vm245 = vcmp.ge.f32.partialorder %v229, 0.0
      %vm246 = vcmp.ge.f32.partialorder %v230, 0.0
      %vm247 = vcmp.ge.f32.partialorder %v231, 0.0
      %vm248 = vcmp.ge.f32.partialorder %v232, 0.0
      %vm249 = vcmp.ge.f32.partialorder %v233, 0.0
      %vm250 = vcmp.ge.f32.partialorder %v234, 0.0
      %vm251 = vcmp.ge.f32.partialorder %v235, 0.0
      %v252 = vmul.f32 %v220, 0.01
      %v253 = vmul.f32 %v221, 0.01
      %v254 = vmul.f32 %v222, 0.01
      %v255 = vmul.f32 %v223, 0.01
      %v256 = vmul.f32 %v224, 0.01
      %v257 = vmul.f32 %v225, 0.01
      %v258 = vmul.f32 %v226, 0.01
      %v259 = vmul.f32 %v227, 0.01
      %v260 = vmul.f32 %v228, 0.01
      %v261 = vmul.f32 %v229, 0.01
      %v262 = vmul.f32 %v230, 0.01
      %v263 = vmul.f32 %v231, 0.01
      %v264 = vmul.f32 %v232, 0.01
      %v265 = vmul.f32 %v233, 0.01
      %v266 = vmul.f32 %v234, 0.01
      %v267 = vmul.f32 %v235, 0.01
      %v268 = vsel %vm236, %v220, %v252
      %v269 = vsel %vm237, %v221, %v253
      %v270 = vsel %vm238, %v222, %v254
      %v271 = vsel %vm239, %v223, %v255
      %v272 = vsel %vm240, %v224, %v256
      %v273 = vsel %vm241, %v225, %v257
      %v274 = vsel %vm242, %v226, %v258
      %v275 = vsel %vm243, %v227, %v259
      %v276 = vsel %vm244, %v228, %v260
      %v277 = vsel %vm245, %v229, %v261
      %v278 = vsel %vm246, %v230, %v262
      %v279 = vsel %vm247, %v231, %v263
      %v280 = vsel %vm248, %v232, %v264
      %v281 = vsel %vm249, %v233, %v265
      %v282 = vsel %vm250, %v234, %v266
      %v283 = vsel %vm251, %v235, %v267
      %vm284 = vcmask 261120
      %285 = vst.msk [vmem:[%s172] sm:$0xff] %vm284, %v268
      %286 = vst.msk [vmem:[%s172 + $0x8] sm:$0xff] %vm284, %v269
      %287 = vst.msk [vmem:[%s172 + $0x10] sm:$0xff] %vm284, %v270
      %288 = vst.msk [vmem:[%s172 + $0x18] sm:$0xff] %vm284, %v271
      %289 = vst.msk [vmem:[%s172 + $0x20] sm:$0xff] %vm284, %v272
      %290 = vst.msk [vmem:[%s172 + $0x28] sm:$0xff] %vm284, %v273
      %291 = vst.msk [vmem:[%s172 + $0x30] sm:$0xff] %vm284, %v274
      %292 = vst.msk [vmem:[%s172 + $0x38] sm:$0xff] %vm284, %v275
      %293 = vst.msk [vmem:[%s172 + $0x40] sm:$0xff] %vm284, %v276
      %294 = vst.msk [vmem:[%s172 + $0x48] sm:$0xff] %vm284, %v277
      %295 = vst.msk [vmem:[%s172 + $0x50] sm:$0xff] %vm284, %v278
      %296 = vst.msk [vmem:[%s172 + $0x58] sm:$0xff] %vm284, %v279
      %297 = vst.msk [vmem:[%s172 + $0x60] sm:$0xff] %vm284, %v280
      %298 = vst.msk [vmem:[%s172 + $0x68] sm:$0xff] %vm284, %v281
      %299 = vst.msk [vmem:[%s172 + $0x70] sm:$0xff] %vm284, %v282
      %300 = vst.msk [vmem:[%s172 + $0x78] sm:$0xff] %vm284, %v283
      %s301 = smul.u32 16, %s14
      %p302 = scmp.lt.s32.totalorder %s301, 63
      %s303 = scalar_select %p302, %s301, 63
      %s304 = smul.addr %s303, 8
      %s305 = scalar_lea.vmem %s3, %s304
      // Predicated region
      $region33: #{convt_block.3} parent=31 // pred_check
        %p306 = pneg %p100
      $region34: #{convt_block.3} parent=31 // pred_check_branch
        %308 = sbr.rel (%p306) target = $region36
      $region35: #{convt_block.3} parent=31 // pred_region
        %s309 = smul.u32 16, %s14
      $region36: #{convt_block.3} parent=31 // pred_fallthru
        _
    $region32: #{convt_block.3} parent=5 // pred_fallthru
      _
    %p310 = scmp.le.s32.totalorder 2, %s9
    // Predicated region
    $region37: #{convt_block.3} parent=5 // pred_check
      %p311 = pneg %p310
    $region38: #{convt_block.3} parent=5 // pred_check_branch
      %313 = sbr.rel (%p311) target = $region40
    $region39: #{convt_block.3} parent=5 // pred_region
      %s314 = ssub.s32 %s9, 2
      // Predicated region
      $region41: #{convt_block.3} parent=39 // pred_check
        %p315 = pneg %p106
      $region42: #{convt_block.3} parent=39 // pred_check_branch
        %317 = sbr.rel (%p315) target = $region44
      $region43: #{convt_block.3} parent=39 // pred_region
        %s318 = smul.u32 16, %s15
        %p319 = scmp.lt.s32.totalorder %s318, 63
        %s320 = scalar_select %p319, %s318, 63
        %s321 = smul.addr %s320, 8
        %s322 = scalar_lea.vmem %s3, %s321
      $region44: #{convt_block.3} parent=39 // pred_fallthru
        _
    $region40: #{convt_block.3} parent=5 // pred_fallthru
      _
  $region6: #{convt_block.3} parent=0 // loop_footer
    %s13 = sadd.s32 1, %s9
  $region7: #{convt_block.3} parent=0 // loop_footer_branch
    %8 = sbr.rel target = $region3
  $region8: #{convt_block.3} parent=0 // loop_exit
    _

// kernel: convt_block.2
$region0: #{convt_block.2}
  #allocation0 [shape = 'u32[]', space=smem, size = 0x4, offset = 0x4, fixed_abs, tag = 'smem constant byte address 0x4 - core index']
  #allocation1 [shape = 'u32[144,128]{1,0:T(1,128)}', space=vmem, size = 0x12000, scoped, tag = 'internal scratch']
  %s0 = inlined_call_operand.vmem [shape: bf16[512,16], index: 0, kind: input, shape index: {}]
  %s1 = inlined_call_operand.vmem [shape: bf16[16,32], index: 1, kind: input, shape index: {}]
  %s2 = inlined_call_operand.vmem [shape: f32[512,32], index: 2, kind: output, shape index: {0}]
  %s3 = inlined_call_operand.vmem [shape: f32[4,1,32], index: 3, kind: output, shape index: {1}]
  %s4 = inlined_call_operand.vmem [shape: f32[4,1,32], index: 4, kind: output, shape index: {2}]
  %5 = xla_tuple %s2, %s3, %s4
  %s6 = sld [smem:[#allocation0]]
  $region57: #{convt_block.2} parent=0
    _
  %s8 = ssub.s32 1, %s6
  %s9 = scalar_select 0, %s8, %s6
  loop: start=0, step=1, limit=6
  $region2: #{convt_block.2} parent=0 // loop_pre_header
    _
  $region3: #{convt_block.2} parent=0 // loop_header
    %s11 = sphi 0, %s15
    %p12 = scmp.ge.s32.totalorder %s11, 6
    %s21 = sphi 0, %s23
    %s24 = sphi 0, %s21
    %s25 = sphi 0, %s24
    %s41 = sphi 0, %s25
    %s45 = sphi 0, %s45
    %s47 = sphi 0, %s45
    %s48 = sphi 0, %s47
    %s62 = sphi 0, %s48
    %s68 = sphi 0, %s70
    %s71 = sphi 0, %s68
    %s72 = sphi 0, %s71
    %s88 = sphi 0, %s72
    %s94 = sphi 0, %s96
    %s97 = sphi 0, %s94
    %s98 = sphi 0, %s97
    %s114 = sphi 0, %s98
    %s120 = sphi 0, %s122
    %s123 = sphi 0, %s120
    %s124 = sphi 0, %s123
    %s140 = sphi 0, %s124
  $region4: #{convt_block.2} parent=0 // loop_header_branch
    %14 = sbr.rel (%p12) target = $region8
  $region5: #{convt_block.2} parent=0 // loop_body
    %s16 = ssub.s32 %s11, 1
    %s17 = ssub.s32 %s11, 2
    %s18 = sadd.s32 %s11, 1
    %s19 = ssub.s32 %s11, %s18
    %p20 = scmp.eq.s32.totalorder %s19, 0
    %s22 = sadd.s32 %s21, 1
    %s23 = scalar_select %p20, %s21, %s22
    %p26 = pneg %p20
    %p27 = scmp.eq.s32.totalorder %s11, 3
    %p28 = por %p26, %p27
    %p29 = scmp.ne.s32.totalorder %s21, %s24
    %p30 = scmp.eq.s32.totalorder %s11, 0
    %p31 = por %p29, %p30
    %p32 = scmp.ne.s32.totalorder %s21, %s24
    %p33 = scmp.eq.s32.totalorder %s16, 3
    %p34 = por %p32, %p33
    %p35 = scmp.ne.s32.totalorder %s24, %s25
    %p36 = scmp.eq.s32.totalorder %s16, 0
    %p37 = por %p35, %p36
    %p38 = scmp.ne.s32.totalorder %s24, %s25
    %p39 = scmp.eq.s32.totalorder %s17, 3
    %p40 = por %p38, %p39
    %p42 = scmp.ne.s32.totalorder %s25, %s41
    %p43 = scmp.eq.s32.totalorder %s17, 0
    %p44 = por %p42, %p43
    %s46 = sadd.s32 %s45, 1
    %p49 = scmp.eq.s32.totalorder %s11, 3
    %p50 = scmp.ne.s32.totalorder %s45, %s47
    %p51 = scmp.eq.s32.totalorder %s11, 0
    %p52 = por %p50, %p51
    %p53 = scmp.ne.s32.totalorder %s45, %s47
    %p54 = scmp.eq.s32.totalorder %s16, 3
    %p55 = por %p53, %p54
    %p56 = scmp.ne.s32.totalorder %s47, %s48
    %p57 = scmp.eq.s32.totalorder %s16, 0
    %p58 = por %p56, %p57
    %p59 = scmp.ne.s32.totalorder %s47, %s48
    %p60 = scmp.eq.s32.totalorder %s17, 3
    %p61 = por %p59, %p60
    %p63 = scmp.ne.s32.totalorder %s48, %s62
    %p64 = scmp.eq.s32.totalorder %s17, 0
    %p65 = por %p63, %p64
    %s66 = ssub.s32 %s11, %s18
    %p67 = scmp.eq.s32.totalorder %s66, 0
    %s69 = sadd.s32 %s68, 1
    %s70 = scalar_select %p67, %s68, %s69
    %p73 = pneg %p67
    %p74 = scmp.eq.s32.totalorder %s11, 3
    %p75 = por %p73, %p74
    %p76 = scmp.ne.s32.totalorder %s68, %s71
    %p77 = scmp.eq.s32.totalorder %s11, 0
    %p78 = por %p76, %p77
    %p79 = scmp.ne.s32.totalorder %s68, %s71
    %p80 = scmp.eq.s32.totalorder %s16, 3
    %p81 = por %p79, %p80
    %p82 = scmp.ne.s32.totalorder %s71, %s72
    %p83 = scmp.eq.s32.totalorder %s16, 0
    %p84 = por %p82, %p83
    %p85 = scmp.ne.s32.totalorder %s71, %s72
    %p86 = scmp.eq.s32.totalorder %s17, 3
    %p87 = por %p85, %p86
    %p89 = scmp.ne.s32.totalorder %s72, %s88
    %p90 = scmp.eq.s32.totalorder %s17, 0
    %p91 = por %p89, %p90
    %s92 = ssub.s32 %s11, %s18
    %p93 = scmp.eq.s32.totalorder %s92, 0
    %s95 = sadd.s32 %s94, 1
    %s96 = scalar_select %p93, %s94, %s95
    %p99 = pneg %p93
    %p100 = scmp.eq.s32.totalorder %s11, 3
    %p101 = por %p99, %p100
    %p102 = scmp.ne.s32.totalorder %s94, %s97
    %p103 = scmp.eq.s32.totalorder %s11, 0
    %p104 = por %p102, %p103
    %p105 = scmp.ne.s32.totalorder %s94, %s97
    %p106 = scmp.eq.s32.totalorder %s16, 3
    %p107 = por %p105, %p106
    %p108 = scmp.ne.s32.totalorder %s97, %s98
    %p109 = scmp.eq.s32.totalorder %s16, 0
    %p110 = por %p108, %p109
    %p111 = scmp.ne.s32.totalorder %s97, %s98
    %p112 = scmp.eq.s32.totalorder %s17, 3
    %p113 = por %p111, %p112
    %p115 = scmp.ne.s32.totalorder %s98, %s114
    %p116 = scmp.eq.s32.totalorder %s17, 0
    %p117 = por %p115, %p116
    %s118 = ssub.s32 %s11, %s18
    %p119 = scmp.eq.s32.totalorder %s118, 0
    %s121 = sadd.s32 %s120, 1
    %s122 = scalar_select %p119, %s120, %s121
    %p125 = pneg %p119
    %p126 = scmp.eq.s32.totalorder %s11, 3
    %p127 = por %p125, %p126
    %p128 = scmp.ne.s32.totalorder %s120, %s123
    %p129 = scmp.eq.s32.totalorder %s11, 0
    %p130 = por %p128, %p129
    %p131 = scmp.ne.s32.totalorder %s120, %s123
    %p132 = scmp.eq.s32.totalorder %s16, 3
    %p133 = por %p131, %p132
    %p134 = scmp.ne.s32.totalorder %s123, %s124
    %p135 = scmp.eq.s32.totalorder %s16, 0
    %p136 = por %p134, %p135
    %p137 = scmp.ne.s32.totalorder %s123, %s124
    %p138 = scmp.eq.s32.totalorder %s17, 3
    %p139 = por %p137, %p138
    %p141 = scmp.ne.s32.totalorder %s124, %s140
    %p142 = scmp.eq.s32.totalorder %s17, 0
    %p143 = por %p141, %p142
    %p144 = scmp.le.s32.totalorder 1, %s11
    %p145 = scmp.lt.s32.totalorder %s11, 5
    %p146 = pnand %p144, %p145
    %p147 = pneg %p146
    // Predicated region
    $region9: #{convt_block.2} parent=5 // pred_check
      _
    $region10: #{convt_block.2} parent=5 // pred_check_branch
      %149 = sbr.rel (%p146) target = $region12
    $region11: #{convt_block.2} parent=5 // pred_region
      %s150 = ssub.s32 %s11, 1
      // Predicated region
      $region13: #{convt_block.2} parent=11 // pred_check
        %p151 = pneg %p58
      $region14: #{convt_block.2} parent=11 // pred_check_branch
        %153 = sbr.rel (%p151) target = $region16
      $region15: #{convt_block.2} parent=11 // pred_region
        _
      $region16: #{convt_block.2} parent=11 // pred_fallthru
        _
    $region12: #{convt_block.2} parent=5 // pred_fallthru
      _
    %p154 = scmp.lt.s32.totalorder %s11, 4
    // Predicated region
    $region17: #{convt_block.2} parent=5 // pred_check
      %p155 = pneg %p154
    $region18: #{convt_block.2} parent=5 // pred_check_branch
      %157 = sbr.rel (%p155) target = $region20
    $region19: #{convt_block.2} parent=5 // pred_region
      // Predicated region
      $region21: #{convt_block.2} parent=19 // pred_check
        %p158 = pneg %p31
      $region22: #{convt_block.2} parent=19 // pred_check_branch
        %160 = sbr.rel (%p158) target = $region24
      $region23: #{convt_block.2} parent=19 // pred_region
        %s161 = smul.u32 16, %s11
        %p162 = scmp.lt.s32.totalorder %s161, 63
        %s163 = scalar_select %p162, %s161, 63
        %s164 = smul.addr %s163, 4
        %s165 = scalar_lea.vmem %s0, %s164
        %s166 = smul.u32 16, %s11
      $region24: #{convt_block.2} parent=19 // pred_fallthru
        _
    $region20: #{convt_block.2} parent=5 // pred_fallthru
      _
    %p167 = scmp.le.s32.totalorder 1, %s11
    %p168 = scmp.lt.s32.totalorder %s11, 5
    %p169 = pnand %p167, %p168
    %p170 = pneg %p169
    // Predicated region
    $region25: #{convt_block.2} parent=5 // pred_check
      _
    $region26: #{convt_block.2} parent=5 // pred_check_branch
      %172 = sbr.rel (%p169) target = $region28
    $region27: #{convt_block.2} parent=5 // pred_region
      %s173 = ssub.s32 %s11, 1
      %s174 = smul.u32 16, %s16
      %p175 = scmp.lt.s32.totalorder %s174, 63
      %s176 = scalar_select %p175, %s174, 63
      %s177 = smul.addr %s176, 4
      %s178 = scalar_lea.vmem %s0, %s177
      %p179 = pneg %p37
      %p180 = pneg %p34
      %p181 = pneg %p58
      %p182 = pneg %p55
      %p183 = pneg %p84
      %p184 = pneg %p81
      %s185 = smul.u32 16, %s16
      %p186 = scmp.lt.s32.totalorder %s185, 63
      %s187 = scalar_select %p186, %s185, 63
      %s188 = smul.addr %s187, 8
      %s189 = scalar_lea.vmem %s2, %s188
      %p190 = pneg %p110
      %p191 = pneg %p107
      %p192 = scmp.lt.s32.totalorder %s16, 3
      %s193 = scalar_select %p192, %s16, 3
      %s194 = scalar_lea.vmem %s3, %s193
      %p195 = pneg %p136
      %p196 = pneg %p133
      %p197 = scmp.lt.s32.totalorder %s16, 3
      %s198 = scalar_select %p197, %s16, 3
      %s199 = scalar_lea.vmem %s4, %s198
      %s200 = smul.u32 16, %s16
      %p201 = scmp.lt.s32.totalorder %s200, 63
      %s202 = scalar_select %p201, %s200, 63
      %s203 = smul.addr %s202, 4
      %s204 = scalar_lea.vmem %s0, %s203
      %s205 = smul.u32 16, %s16
      %s206 = smul.u32 16, %s16
      %p207 = scmp.lt.s32.totalorder %s206, 63
      %s208 = scalar_select %p207, %s206, 63
      %s209 = smul.addr %s208, 8
      %s210 = scalar_lea.vmem %s2, %s209
      %s211 = smul.u32 16, %s16
      %p212 = scmp.lt.s32.totalorder %s16, 3
      %s213 = scalar_select %p212, %s16, 3
      %s214 = scalar_lea.vmem %s3, %s213
      %p215 = scmp.lt.s32.totalorder %s16, 3
      %s216 = scalar_select %p215, %s16, 3
      %s217 = scalar_lea.vmem %s4, %s216
      %v219 = vld [vmem:[%s204] sm:$0xf]
      %v220 = vld [vmem:[%s204 + $0x4] sm:$0xf]
      %v221 = vld [vmem:[%s204 + $0x8] sm:$0xf]
      %v222 = vld [vmem:[%s204 + $0xc] sm:$0xf]
      %v223 = vld [vmem:[%s204 + $0x10] sm:$0xf]
      %v224 = vld [vmem:[%s204 + $0x14] sm:$0xf]
      %v225 = vld [vmem:[%s204 + $0x18] sm:$0xf]
      %v226 = vld [vmem:[%s204 + $0x1c] sm:$0xf]
      %v227 = vld [vmem:[%s204 + $0x20] sm:$0xf]
      %v228 = vld [vmem:[%s204 + $0x24] sm:$0xf]
      %v229 = vld [vmem:[%s204 + $0x28] sm:$0xf]
      %v230 = vld [vmem:[%s204 + $0x2c] sm:$0xf]
      %v231 = vld [vmem:[%s204 + $0x30] sm:$0xf]
      %v232 = vld [vmem:[%s204 + $0x34] sm:$0xf]
      %v233 = vld [vmem:[%s204 + $0x38] sm:$0xf]
      %v234 = vld [vmem:[%s204 + $0x3c] sm:$0xf]
      %v235 = vld [vmem:[%s1] sm:$0xf]
      %v236 = vld [vmem:[%s1 + $0x4] sm:$0xf]
      %v253 = vunpack.c.l.b16 %v219
      %v254 = vunpack.c.l.b16 %v220
      %v255 = vunpack.c.l.b16 %v221
      %v256 = vunpack.c.l.b16 %v222
      %v257 = vunpack.c.l.b16 %v223
      %v258 = vunpack.c.l.b16 %v224
      %v259 = vunpack.c.l.b16 %v225
      %v260 = vunpack.c.l.b16 %v226
      %v261 = vunpack.c.l.b16 %v227
      %v262 = vunpack.c.l.b16 %v228
      %v263 = vunpack.c.l.b16 %v229
      %v264 = vunpack.c.l.b16 %v230
      %v265 = vunpack.c.l.b16 %v231
      %v266 = vunpack.c.l.b16 %v232
      %v267 = vunpack.c.l.b16 %v233
      %v268 = vunpack.c.l.b16 %v234
      %v269 = vpack.c.b16 %v254, %v253
      %v270 = vpack.c.b16 %v256, %v255
      %v271 = vpack.c.b16 %v258, %v257
      %v272 = vpack.c.b16 %v260, %v259
      %v273 = vpack.c.b16 %v262, %v261
      %v274 = vpack.c.b16 %v264, %v263
      %v275 = vpack.c.b16 %v266, %v265
      %v276 = vpack.c.b16 %v268, %v267
      %v279 = vunpack.c.l.b16 %v235
      %v280 = vunpack.c.l.b16 %v236
      %v281 = vpack.c.b16 %v280, %v279
      %vm283 = vcmask 130048
      %v285 = vsel %vm283, %v269, 0
      %v288 = vsel %vm283, %v270, 0
      %v291 = vsel %vm283, %v271, 0
      %v294 = vsel %vm283, %v272, 0
      %v297 = vsel %vm283, %v273, 0
      %v300 = vsel %vm283, %v274, 0
      %v303 = vsel %vm283, %v275, 0
      %v306 = vsel %vm283, %v276, 0
      %308 = vmatprep.subr.bf16.mxu0 0
      %309 = vmatpush1.bf16.msra.mxu0 0
      %310 = vmatprep.subr.bf16.mxu0 0
      %311 = vmatpush1.bf16.msra.mxu0 0
      %312 = vmatprep.subr.bf16.mxu0 0
      %313 = vmatpush1.bf16.msra.mxu0 0
      %314 = vmatprep.subr.bf16.mxu0 0
      %315 = vmatpush1.bf16.msra.mxu0 0
      %316 = vmatprep.subr.bf16.mxu0 0
      %317 = vmatpush1.bf16.msra.mxu0 0
      %318 = vmatprep.subr.bf16.mxu0 0
      %319 = vmatpush1.bf16.msra.mxu0 0
      %320 = vmatprep.subr.bf16.mxu0 0
      %321 = vmatpush1.bf16.msra.mxu0 0
      %322 = vmatprep.subr.bf16.mxu0 0
      %323 = vmatpush1.bf16.msra.mxu0 %v281
      %324 = vmatprep.subr.bf16.mxu0 0
      %325 = vmatpush2.bf16.msra.mxu0 0
      %326 = vmatprep.subr.bf16.mxu0 0
      %327 = vmatpush2.bf16.msra.mxu0 0
      %328 = vmatprep.subr.bf16.mxu0 0
      %329 = vmatpush2.bf16.msra.mxu0 0
      %330 = vmatprep.subr.bf16.mxu0 0
      %331 = vmatpush2.bf16.msra.mxu0 0
      %332 = vmatprep.subr.bf16.mxu0 0
      %333 = vmatpush2.bf16.msra.mxu0 0
      %334 = vmatprep.subr.bf16.mxu0 0
      %335 = vmatpush2.bf16.msra.mxu0 0
      %336 = vmatprep.subr.bf16.mxu0 0
      %337 = vmatpush2.bf16.msra.mxu0 0
      %338 = vmatprep.subr.bf16.mxu0 0
      %339 = vmatpush2.bf16.msra.mxu0 0
      %340 = vmatprep.mubr.bf16.mxu0 0
      %341 = vmatmul.mubr.bf16.gmra.mxu0 %v285
      %v342 = vpop.f32.mrf.mxu0
      %v343 = vadd.f32 0.0, %v342
      %v344 = vpop.f32.mrf.mxu0
      %v345 = vpop.f32.mrf.mxu0
      %v346 = vadd.f32 0.0, %v345
      %v347 = vpop.f32.mrf.mxu0
      %348 = vmatprep.mubr.bf16.mxu0 0
      %349 = vmatmul.mubr.bf16.gmra.mxu0 %v288
      %v350 = vpop.f32.mrf.mxu0
      %v351 = vadd.f32 0.0, %v350
      %v352 = vpop.f32.mrf.mxu0
      %v353 = vpop.f32.mrf.mxu0
      %v354 = vadd.f32 0.0, %v353
      %v355 = vpop.f32.mrf.mxu0
      %356 = vmatprep.mubr.bf16.mxu0 0
      %357 = vmatmul.mubr.bf16.gmra.mxu0 %v291
      %v358 = vpop.f32.mrf.mxu0
      %v359 = vadd.f32 0.0, %v358
      %v360 = vpop.f32.mrf.mxu0
      %v361 = vpop.f32.mrf.mxu0
      %v362 = vadd.f32 0.0, %v361
      %v363 = vpop.f32.mrf.mxu0
      %364 = vmatprep.mubr.bf16.mxu0 0
      %365 = vmatmul.mubr.bf16.gmra.mxu0 %v294
      %v366 = vpop.f32.mrf.mxu0
      %v367 = vadd.f32 0.0, %v366
      %v368 = vpop.f32.mrf.mxu0
      %v369 = vpop.f32.mrf.mxu0
      %v370 = vadd.f32 0.0, %v369
      %v371 = vpop.f32.mrf.mxu0
      %372 = vmatprep.mubr.bf16.mxu0 0
      %373 = vmatmul.mubr.bf16.gmra.mxu0 %v297
      %v374 = vpop.f32.mrf.mxu0
      %v375 = vadd.f32 0.0, %v374
      %v376 = vpop.f32.mrf.mxu0
      %v377 = vpop.f32.mrf.mxu0
      %v378 = vadd.f32 0.0, %v377
      %v379 = vpop.f32.mrf.mxu0
      %380 = vmatprep.mubr.bf16.mxu0 0
      %381 = vmatmul.mubr.bf16.gmra.mxu0 %v300
      %v382 = vpop.f32.mrf.mxu0
      %v383 = vadd.f32 0.0, %v382
      %v384 = vpop.f32.mrf.mxu0
      %v385 = vpop.f32.mrf.mxu0
      %v386 = vadd.f32 0.0, %v385
      %v387 = vpop.f32.mrf.mxu0
      %388 = vmatprep.mubr.bf16.mxu0 0
      %389 = vmatmul.mubr.bf16.gmra.mxu0 %v303
      %v390 = vpop.f32.mrf.mxu0
      %v391 = vadd.f32 0.0, %v390
      %v392 = vpop.f32.mrf.mxu0
      %v393 = vpop.f32.mrf.mxu0
      %v394 = vadd.f32 0.0, %v393
      %v395 = vpop.f32.mrf.mxu0
      %396 = vmatprep.mubr.bf16.mxu0 0
      %397 = vmatmul.mubr.bf16.gmra.mxu0 %v306
      %v398 = vpop.f32.mrf.mxu0
      %v399 = vadd.f32 0.0, %v398
      %v400 = vpop.f32.mrf.mxu0
      %v401 = vpop.f32.mrf.mxu0
      %v402 = vadd.f32 0.0, %v401
      %v403 = vpop.f32.mrf.mxu0
      %404 = vdwg.mxu0
      %vm405 = vcmask 261120
      %406 = vst.msk [vmem:[%s210] sm:$0xff] %vm405, %v343
      %407 = vst.msk [vmem:[%s210 + $0x8] sm:$0xff] %vm405, %v346
      %408 = vst.msk [vmem:[%s210 + $0x10] sm:$0xff] %vm405, %v351
      %409 = vst.msk [vmem:[%s210 + $0x18] sm:$0xff] %vm405, %v354
      %410 = vst.msk [vmem:[%s210 + $0x20] sm:$0xff] %vm405, %v359
      %411 = vst.msk [vmem:[%s210 + $0x28] sm:$0xff] %vm405, %v362
      %412 = vst.msk [vmem:[%s210 + $0x30] sm:$0xff] %vm405, %v367
      %413 = vst.msk [vmem:[%s210 + $0x38] sm:$0xff] %vm405, %v370
      %414 = vst.msk [vmem:[%s210 + $0x40] sm:$0xff] %vm405, %v375
      %415 = vst.msk [vmem:[%s210 + $0x48] sm:$0xff] %vm405, %v378
      %416 = vst.msk [vmem:[%s210 + $0x50] sm:$0xff] %vm405, %v383
      %417 = vst.msk [vmem:[%s210 + $0x58] sm:$0xff] %vm405, %v386
      %418 = vst.msk [vmem:[%s210 + $0x60] sm:$0xff] %vm405, %v391
      %419 = vst.msk [vmem:[%s210 + $0x68] sm:$0xff] %vm405, %v394
      %420 = vst.msk [vmem:[%s210 + $0x70] sm:$0xff] %vm405, %v399
      %421 = vst.msk [vmem:[%s210 + $0x78] sm:$0xff] %vm405, %v402
      %v422 = vsel %vm405, %v343, 0.0
      %v423 = vsel %vm405, %v346, 0.0
      %v424 = vadd.f32 %v422, %v423
      %v425 = vsel %vm405, %v351, 0.0
      %v426 = vadd.f32 %v424, %v425
      %v427 = vsel %vm405, %v354, 0.0
      %v428 = vadd.f32 %v426, %v427
      %v429 = vsel %vm405, %v359, 0.0
      %v430 = vadd.f32 %v428, %v429
      %v431 = vsel %vm405, %v362, 0.0
      %v432 = vadd.f32 %v430, %v431
      %v433 = vsel %vm405, %v367, 0.0
      %v434 = vadd.f32 %v432, %v433
      %v435 = vsel %vm405, %v370, 0.0
      %v436 = vadd.f32 %v434, %v435
      %v437 = vsel %vm405, %v375, 0.0
      %v438 = vadd.f32 %v436, %v437
      %v439 = vsel %vm405, %v378, 0.0
      %v440 = vadd.f32 %v438, %v439
      %v441 = vsel %vm405, %v383, 0.0
      %v442 = vadd.f32 %v440, %v441
      %v443 = vsel %vm405, %v386, 0.0
      %v444 = vadd.f32 %v442, %v443
      %v445 = vsel %vm405, %v391, 0.0
      %v446 = vadd.f32 %v444, %v445
      %v447 = vsel %vm405, %v394, 0.0
      %v448 = vadd.f32 %v446, %v447
      %v449 = vsel %vm405, %v399, 0.0
      %v450 = vadd.f32 %v448, %v449
      %v451 = vsel %vm405, %v402, 0.0
      %v452 = vadd.f32 %v450, %v451
      %v453 = vrot.slane %v452, 4
      %v454 = vadd.f32 %v452, %v453
      %v455 = vrot.slane %v454, 2
      %v456 = vadd.f32 %v454, %v455
      %v457 = vrot.slane %v456, 1
      %v458 = vadd.f32 %v456, %v457
      %vm459 = vcmask 253952
      %460 = vst.msk [vmem:[%s214] sm:$0x1] %vm459, %v458
      %v461 = vmul.f32 %v343, %v343
      %v462 = vmul.f32 %v346, %v346
      %v463 = vmul.f32 %v351, %v351
      %v464 = vmul.f32 %v354, %v354
      %v465 = vmul.f32 %v359, %v359
      %v466 = vmul.f32 %v362, %v362
      %v467 = vmul.f32 %v367, %v367
      %v468 = vmul.f32 %v370, %v370
      %v469 = vmul.f32 %v375, %v375
      %v470 = vmul.f32 %v378, %v378
      %v471 = vmul.f32 %v383, %v383
      %v472 = vmul.f32 %v386, %v386
      %v473 = vmul.f32 %v391, %v391
      %v474 = vmul.f32 %v394, %v394
      %v475 = vmul.f32 %v399, %v399
      %v476 = vmul.f32 %v402, %v402
      %v477 = vsel %vm405, %v461, 0.0
      %v478 = vsel %vm405, %v462, 0.0
      %v479 = vadd.f32 %v477, %v478
      %v480 = vsel %vm405, %v463, 0.0
      %v481 = vadd.f32 %v479, %v480
      %v482 = vsel %vm405, %v464, 0.0
      %v483 = vadd.f32 %v481, %v482
      %v484 = vsel %vm405, %v465, 0.0
      %v485 = vadd.f32 %v483, %v484
      %v486 = vsel %vm405, %v466, 0.0
      %v487 = vadd.f32 %v485, %v486
      %v488 = vsel %vm405, %v467, 0.0
      %v489 = vadd.f32 %v487, %v488
      %v490 = vsel %vm405, %v468, 0.0
      %v491 = vadd.f32 %v489, %v490
      %v492 = vsel %vm405, %v469, 0.0
      %v493 = vadd.f32 %v491, %v492
      %v494 = vsel %vm405, %v470, 0.0
      %v495 = vadd.f32 %v493, %v494
      %v496 = vsel %vm405, %v471, 0.0
      %v497 = vadd.f32 %v495, %v496
      %v498 = vsel %vm405, %v472, 0.0
      %v499 = vadd.f32 %v497, %v498
      %v500 = vsel %vm405, %v473, 0.0
      %v501 = vadd.f32 %v499, %v500
      %v502 = vsel %vm405, %v474, 0.0
      %v503 = vadd.f32 %v501, %v502
      %v504 = vsel %vm405, %v475, 0.0
      %v505 = vadd.f32 %v503, %v504
      %v506 = vsel %vm405, %v476, 0.0
      %v507 = vadd.f32 %v505, %v506
      %v508 = vrot.slane %v507, 4
      %v509 = vadd.f32 %v507, %v508
      %v510 = vrot.slane %v509, 2
      %v511 = vadd.f32 %v509, %v510
      %v512 = vrot.slane %v511, 1
      %v513 = vadd.f32 %v511, %v512
      %514 = vst.msk [vmem:[%s217] sm:$0x1] %vm459, %v513
      %s515 = smul.u32 16, %s16
      %p516 = scmp.lt.s32.totalorder %s515, 63
      %s517 = scalar_select %p516, %s515, 63
      %s518 = smul.addr %s517, 8
      %s519 = scalar_lea.vmem %s2, %s518
      %p520 = scmp.lt.s32.totalorder %s16, 3
      %s521 = scalar_select %p520, %s16, 3
      %s522 = scalar_lea.vmem %s3, %s521
      %p523 = scmp.lt.s32.totalorder %s16, 3
      %s524 = scalar_select %p523, %s16, 3
      %s525 = scalar_lea.vmem %s4, %s524
      // Predicated region
      $region29: #{convt_block.2} parent=27 // pred_check
        %p526 = pneg %p81
      $region30: #{convt_block.2} parent=27 // pred_check_branch
        %528 = sbr.rel (%p526) target = $region32
      $region31: #{convt_block.2} parent=27 // pred_region
        %s529 = smul.u32 16, %s16
      $region32: #{convt_block.2} parent=27 // pred_fallthru
        _
      // Predicated region
      $region33: #{convt_block.2} parent=27 // pred_check
        %p530 = pneg %p107
      $region34: #{convt_block.2} parent=27 // pred_check_branch
        %532 = sbr.rel (%p530) target = $region36
      $region35: #{convt_block.2} parent=27 // pred_region
        _
      $region36: #{convt_block.2} parent=27 // pred_fallthru
        _
      // Predicated region
      $region37: #{convt_block.2} parent=27 // pred_check
        %p533 = pneg %p133
      $region38: #{convt_block.2} parent=27 // pred_check_branch
        %535 = sbr.rel (%p533) target = $region40
      $region39: #{convt_block.2} parent=27 // pred_region
        _
      $region40: #{convt_block.2} parent=27 // pred_fallthru
        _
    $region28: #{convt_block.2} parent=5 // pred_fallthru
      _
    %p536 = scmp.le.s32.totalorder 2, %s11
    // Predicated region
    $region41: #{convt_block.2} parent=5 // pred_check
      %p537 = pneg %p536
    $region42: #{convt_block.2} parent=5 // pred_check_branch
      %539 = sbr.rel (%p537) target = $region44
    $region43: #{convt_block.2} parent=5 // pred_region
      %s540 = ssub.s32 %s11, 2
      // Predicated region
      $region45: #{convt_block.2} parent=43 // pred_check
        %p541 = pneg %p87
      $region46: #{convt_block.2} parent=43 // pred_check_branch
        %543 = sbr.rel (%p541) target = $region48
      $region47: #{convt_block.2} parent=43 // pred_region
        %s544 = smul.u32 16, %s17
        %p545 = scmp.lt.s32.totalorder %s544, 63
        %s546 = scalar_select %p545, %s544, 63
        %s547 = smul.addr %s546, 8
        %s548 = scalar_lea.vmem %s2, %s547
      $region48: #{convt_block.2} parent=43 // pred_fallthru
        _
      // Predicated region
      $region49: #{convt_block.2} parent=43 // pred_check
        %p549 = pneg %p113
      $region50: #{convt_block.2} parent=43 // pred_check_branch
        %551 = sbr.rel (%p549) target = $region52
      $region51: #{convt_block.2} parent=43 // pred_region
        %p552 = scmp.lt.s32.totalorder %s17, 3
        %s553 = scalar_select %p552, %s17, 3
        %s554 = scalar_lea.vmem %s3, %s553
      $region52: #{convt_block.2} parent=43 // pred_fallthru
        _
      // Predicated region
      $region53: #{convt_block.2} parent=43 // pred_check
        %p555 = pneg %p139
      $region54: #{convt_block.2} parent=43 // pred_check_branch
        %557 = sbr.rel (%p555) target = $region56
      $region55: #{convt_block.2} parent=43 // pred_region
        %p558 = scmp.lt.s32.totalorder %s17, 3
        %s559 = scalar_select %p558, %s17, 3
        %s560 = scalar_lea.vmem %s4, %s559
      $region56: #{convt_block.2} parent=43 // pred_fallthru
        _
    $region44: #{convt_block.2} parent=5 // pred_fallthru
      _
  $region6: #{convt_block.2} parent=0 // loop_footer
    %s15 = sadd.s32 1, %s11
  $region7: #{convt_block.2} parent=0 // loop_footer_branch
    %10 = sbr.rel target = $region3
  $region8: #{convt_block.2} parent=0 // loop_exit
    _

</llo_original>
